<compile_context>
chip_gen: v5e
topology: v5e:2x2
jax: 0.10.0
libtpu: 0.0.40
codegen_flags: <defaults>
</compile_context>

<pallas_src>
import functools

import jax
import jax.numpy as jnp
from jax.experimental import pallas as pl
from jax.experimental.pallas import tpu as pltpu


def _triplet_kernel(a_ref, p_ref, n_ref, m_ref, o_ref, *, tb, total_batch):
    """One batch tile: add its per-sample triplet losses to this split's sum."""
    c = pl.program_id(0)          # split (TensorCore) index
    i = pl.program_id(1)          # batch-tile index within the split

    @pl.when(i == 0)
    def _():
        o_ref[...] = jnp.zeros_like(o_ref)

    a = a_ref[...].astype(jnp.float32)
    p = p_ref[...].astype(jnp.float32)
    n = n_ref[...].astype(jnp.float32)

    dp = a - p
    dn = a - n
    # (a-p)^2 - (a-n)^2 elementwise -> a single reduction over D per tile.
    dd = jnp.sum(dp * dp - dn * dn, axis=1, keepdims=True)        # (tb, 1)

    # Mask ragged-tail rows and duplicated (clamped) tiles: rows >= B give 0,
    # including their (garbage) margins.
    tile_idx = c * pl.num_programs(1) + i
    rows = tile_idx * tb + jax.lax.broadcasted_iota(jnp.int32, dd.shape, 0)
    valid = rows < total_batch

    term = jnp.where(valid, dd + m_ref[...].astype(jnp.float32), 0.0)
    o_ref[...] += jnp.sum(jnp.maximum(term, 0.0))


def triplet_loss_multiple_margins(anchor, positive, negative,
                                  anchor_label, negative_label, margin_matrix,
                                  *, vmem_limit_bytes=32 * 1024 * 1024,
                                  max_rows_per_tile=None):
    """Pallas TPU implementation of TripletLossMultipleMargins.forward -> scalar."""
    B, D = anchor.shape
    assert positive.shape == (B, D) and negative.shape == (B, D)

    # Per-sample margin gather (trivial (B,) gather, done in plain JAX).
    margins = margin_matrix[anchor_label, negative_label].astype(jnp.float32)
    margins = margins.reshape(B, 1)

    # ---- Tile sizing against the lane-padded VMEM footprint -----------------
    itemsize = jnp.dtype(anchor.dtype).itemsize
    d_pad = pl.cdiv(D, 128) * 128                     # lane-padded width in VMEM
    # Per batch row, across all pipeline buffers:
    #   a/p/n : 3 streams x 2 buffers x d_pad * itemsize
    #   margin: (tb,1) f32 lane-padded to 128 lanes x 2 buffers
    per_row_bytes = 3 * 2 * d_pad * itemsize + 2 * 128 * 4
    budget = vmem_limit_bytes // 2                    # headroom for output blocks / compiler scratch
    tb_cap = max(8, (budget // per_row_bytes) // 32 * 32)
    if max_rows_per_tile is not None:
        tb_cap = max(8, min(tb_cap, max_rows_per_tile))

    tb = B if B <= tb_cap else tb_cap                 # full-batch block, or an 8/32-multiple tile
    if tb * per_row_bytes > vmem_limit_bytes:
        # TODO(synk): add a D-chunking inner grid axis for very large embedding dims.
        raise ValueError(f"Embedding dim D={D} too large for "
                         f"vmem_limit_bytes={vmem_limit_bytes}")

    total_tiles = pl.cdiv(B, tb)
    num_splits = min(2, total_tiles)                  # v7x megacore split; harmless on v5e/v6e
    tiles_per_split = pl.cdiv(total_tiles, num_splits)

    if num_splits * tiles_per_split == total_tiles:
        def tile_index(c, i):
            return c * tiles_per_split + i
    else:
        # Clamp the trailing duplicate tile; its rows are >= B so the kernel masks it to 0.
        def tile_index(c, i):
            return jnp.minimum(c * tiles_per_split + i, total_tiles - 1)

    stream_spec = pl.BlockSpec((tb, D), lambda c, i: (tile_index(c, i), 0))
    margin_spec = pl.BlockSpec((tb, 1), lambda c, i: (tile_index(c, i), 0))
    out_spec = pl.BlockSpec((1, 1, 1), lambda c, i: (c, 0, 0))

    kernel = functools.partial(_triplet_kernel, tb=tb, total_batch=B)

    partial_sums = pl.pallas_call(
        kernel,
        out_shape=jax.ShapeDtypeStruct((num_splits, 1, 1), jnp.float32),
        grid_spec=pltpu.PrefetchScalarGridSpec(
            num_scalar_prefetch=0,
            grid=(num_splits, tiles_per_split),
            in_specs=[stream_spec, stream_spec, stream_spec, margin_spec],
            out_specs=out_spec,
        ),
        compiler_params=pltpu.CompilerParams(
            dimension_semantics=("parallel", "arbitrary"),
            vmem_limit_bytes=vmem_limit_bytes,
        ),
    )(anchor, positive, negative, margins)

    return jnp.sum(partial_sums) / jnp.float32(B)


def triplet_loss_ref(anchor, positive, negative, anchor_label, negative_label,
                     margin_matrix):
    """Pure-JAX reference matching the PyTorch module."""
    dp = jnp.sum((anchor - positive) ** 2, axis=1)
    dn = jnp.sum((anchor - negative) ** 2, axis=1)
    m = margin_matrix[anchor_label, negative_label]
    return jnp.mean(jax.nn.relu(dp - dn + m))


if __name__ == "__main__":
    def make_case(key, B, D, C):
        k1, k2, k3, k4, k5, k6 = jax.random.split(key, 6)
        anchor = jax.random.normal(k1, (B, D), dtype=jnp.float32)
        positive = jax.random.normal(k2, (B, D), dtype=jnp.float32)
        negative = jax.random.normal(k3, (B, D), dtype=jnp.float32)
        anchor_label = jax.random.randint(k4, (B,), 0, C)
        negative_label = jax.random.randint(k5, (B,), 0, C)
        margin_matrix = jax.random.uniform(
            k6, (C, C), minval=0.5, maxval=2.0, dtype=jnp.float32)
        return anchor, positive, negative, anchor_label, negative_label, margin_matrix

    key = jax.random.PRNGKey(0)
    k1, k2 = jax.random.split(key)

    # Case 1: small embedding batch (single tile, single split).
    args = make_case(k1, 8, 32, 3)
    loss = jax.block_until_ready(triplet_loss_multiple_margins(*args))
    ref = triplet_loss_ref(*args)
    assert jnp.allclose(loss, ref, atol=1e-5, rtol=1e-5), (loss, ref)

    # Case 2: ragged batch forced onto several small tiles + the 2-way split
    # (exercises the partial-tile and clamped duplicate-tile masking paths).
    args = make_case(k2, 37, 64, 4)
    loss = jax.block_until_ready(
        triplet_loss_multiple_margins(*args, max_rows_per_tile=16))
    ref = triplet_loss_ref(*args)
    assert jnp.allclose(loss, ref, atol=1e-5, rtol=1e-5), (loss, ref)

    print("KERNEL_OK")
</pallas_src>

<mosaic_0001>
module attributes {stable_mosaic.version = 11 : i64} {
  func.func @_triplet_kernel(%arg0: i32, %arg1: i32, %arg2: memref<8x32xf32, #tpu.memory_space<vmem>>, %arg3: memref<8x32xf32, #tpu.memory_space<vmem>>, %arg4: memref<8x32xf32, #tpu.memory_space<vmem>>, %arg5: memref<8x1xf32, #tpu.memory_space<vmem>>, %arg6: memref<1x1x1xf32, #tpu.memory_space<vmem>>) attributes {dimension_semantics = [#tpu.dimension_semantics<parallel>, #tpu.dimension_semantics<arbitrary>], iteration_bounds = array<i64: 1, 1>, scalar_prefetch = 0 : i64, scratch_operands = 0 : i64, tpu.core_type = #tpu.core_type<tc>, window_params = [{transform_indices = @transform_0, window_bounds = array<i64: 8, 32>}, {transform_indices = @transform_1, window_bounds = array<i64: 8, 32>}, {transform_indices = @transform_2, window_bounds = array<i64: 8, 32>}, {transform_indices = @transform_3, window_bounds = array<i64: 8, 1>}, {transform_indices = @transform_4, window_bounds = array<i64: 1, 1, 1>}]} {
    %c0_i32 = arith.constant 0 : i32
    %0 = arith.cmpi eq, %arg1, %c0_i32 : i32
    %1 = arith.extui %0 : i1 to i32
    %c0_i32_0 = arith.constant 0 : i32
    %2 = arith.cmpi ne, %1, %c0_i32_0 : i32
    scf.if %2 {
      %cst_18 = arith.constant 0.000000e+00 : f32
      %35 = vector.broadcast %cst_18 : f32 to vector<1x1x1xf32>
      %c0_19 = arith.constant 0 : index
      %c0_20 = arith.constant 0 : index
      %c0_21 = arith.constant 0 : index
      %36 = vector.load %arg6[%c0_19, %c0_20, %c0_21] : memref<1x1x1xf32, #tpu.memory_space<vmem>>, vector<1x1x1xf32>
      tpu.vector_store %arg6[%c0_19, %c0_20, %c0_21], %35 {strides = array<i32>} : memref<1x1x1xf32, #tpu.memory_space<vmem>>, vector<1x1x1xf32>,
    } else {
    }
    %c0 = arith.constant 0 : index
    %c0_1 = arith.constant 0 : index
    %3 = vector.load %arg2[%c0, %c0_1] : memref<8x32xf32, #tpu.memory_space<vmem>>, vector<8x32xf32>
    %c0_2 = arith.constant 0 : index
    %c0_3 = arith.constant 0 : index
    %4 = vector.load %arg3[%c0_2, %c0_3] : memref<8x32xf32, #tpu.memory_space<vmem>>, vector<8x32xf32>
    %c0_4 = arith.constant 0 : index
    %c0_5 = arith.constant 0 : index
    %5 = vector.load %arg4[%c0_4, %c0_5] : memref<8x32xf32, #tpu.memory_space<vmem>>, vector<8x32xf32>
    %6 = arith.subf %3, %4 : vector<8x32xf32>
    %7 = arith.subf %3, %5 : vector<8x32xf32>
    %8 = arith.mulf %6, %6 : vector<8x32xf32>
    %9 = arith.mulf %7, %7 : vector<8x32xf32>
    %10 = arith.subf %8, %9 : vector<8x32xf32>
    %cst = arith.constant dense<0.000000e+00> : vector<8xf32>
    %11 = vector.multi_reduction <add>, %10, %cst [1] : vector<8x32xf32> to vector<8xf32>
    %12 = vector.shape_cast %11 : vector<8xf32> to vector<8x1xf32>
    %c1_i32 = arith.constant 1 : i32
    %13 = arith.muli %arg0, %c1_i32 : i32
    %14 = arith.addi %13, %arg1 : i32
    %c8_i32 = arith.constant 8 : i32
    %15 = arith.muli %14, %c8_i32 : i32
    %16 = tpu.iota {dimensions = array<i32: 0>} : vector<8x1xi32>
    %17 = vector.broadcast %15 : i32 to vector<8x1xi32>
    %18 = arith.addi %17, %16 : vector<8x1xi32>
    %c8_i32_6 = arith.constant 8 : i32
    %19 = vector.broadcast %c8_i32_6 : i32 to vector<8x1xi32>
    %20 = arith.cmpi slt, %18, %19 : vector<8x1xi32>
    %c0_7 = arith.constant 0 : index
    %c0_8 = arith.constant 0 : index
    %21 = vector.load %arg5[%c0_7, %c0_8] : memref<8x1xf32, #tpu.memory_space<vmem>>, vector<8x1xf32>
    %22 = arith.addf %12, %21 : vector<8x1xf32>
    %cst_9 = arith.constant 0.000000e+00 : f32
    %23 = vector.broadcast %cst_9 : f32 to vector<8x1xf32>
    %24 = arith.select %20, %22, %23 : vector<8x1xi1>, vector<8x1xf32>
    %c0_10 = arith.constant 0 : index
    %c0_11 = arith.constant 0 : index
    %c0_12 = arith.constant 0 : index
    %25 = vector.load %arg6[%c0_10, %c0_11, %c0_12] : memref<1x1x1xf32, #tpu.memory_space<vmem>>, vector<1x1x1xf32>
    %cst_13 = arith.constant 0.000000e+00 : f32
    %26 = vector.broadcast %cst_13 : f32 to vector<8x1xf32>
    %27 = arith.maximumf %24, %26 : vector<8x1xf32>
    %28 = vector.shape_cast %27 : vector<8x1xf32> to vector<1x8x1xf32>
    %cst_14 = arith.constant dense<0.000000e+00> : vector<1xf32>
    %29 = vector.multi_reduction <add>, %28, %cst_14 [1, 2] : vector<1x8x1xf32> to vector<1xf32>
    %30 = vector.shape_cast %29 : vector<1xf32> to vector<1x1x1xf32>
    %31 = vector.extract %30[0, 0, 0] : f32 from vector<1x1x1xf32>
    %32 = vector.broadcast %31 : f32 to vector<1x1x1xf32>
    %33 = arith.addf %25, %32 : vector<1x1x1xf32>
    %c0_15 = arith.constant 0 : index
    %c0_16 = arith.constant 0 : index
    %c0_17 = arith.constant 0 : index
    %34 = vector.load %arg6[%c0_15, %c0_16, %c0_17] : memref<1x1x1xf32, #tpu.memory_space<vmem>>, vector<1x1x1xf32>
    tpu.vector_store %arg6[%c0_15, %c0_16, %c0_17], %33 {strides = array<i32>} : memref<1x1x1xf32, #tpu.memory_space<vmem>>, vector<1x1x1xf32>,
    return
  }
  func.func @transform_0(%arg0: i32, %arg1: i32) -> (i32, i32) {
    %c1_i32 = arith.constant 1 : i32
    %0 = arith.muli %arg0, %c1_i32 : i32
    %1 = arith.addi %0, %arg1 : i32
    %c0_i32 = arith.constant 0 : i32
    %c0_i32_0 = arith.constant 0 : i32
    return %1, %c0_i32 : i32, i32
  }
  func.func @transform_1(%arg0: i32, %arg1: i32) -> (i32, i32) {
    %c1_i32 = arith.constant 1 : i32
    %0 = arith.muli %arg0, %c1_i32 : i32
    %1 = arith.addi %0, %arg1 : i32
    %c0_i32 = arith.constant 0 : i32
    %c0_i32_0 = arith.constant 0 : i32
    return %1, %c0_i32 : i32, i32
  }
  func.func @transform_2(%arg0: i32, %arg1: i32) -> (i32, i32) {
    %c1_i32 = arith.constant 1 : i32
    %0 = arith.muli %arg0, %c1_i32 : i32
    %1 = arith.addi %0, %arg1 : i32
    %c0_i32 = arith.constant 0 : i32
    %c0_i32_0 = arith.constant 0 : i32
    return %1, %c0_i32 : i32, i32
  }
  func.func @transform_3(%arg0: i32, %arg1: i32) -> (i32, i32) {
    %c1_i32 = arith.constant 1 : i32
    %0 = arith.muli %arg0, %c1_i32 : i32
    %1 = arith.addi %0, %arg1 : i32
    %c0_i32 = arith.constant 0 : i32
    %c0_i32_0 = arith.constant 0 : i32
    return %1, %c0_i32 : i32, i32
  }
  func.func @transform_4(%arg0: i32, %arg1: i32) -> (i32, i32, i32) {
    %c0_i32 = arith.constant 0 : i32
    %c0_i32_0 = arith.constant 0 : i32
    %c0_i32_1 = arith.constant 0 : i32
    return %arg0, %c0_i32, %c0_i32_0 : i32, i32, i32
  }
}

</mosaic_0001>

<llo_original>
// kernel: tpu_custom_call.1
$region0: #{tpu_custom_call.1}
  #allocation0 [shape = 'u32[]', space=smem, size = 0x4, offset = 0x4, fixed_abs, tag = 'smem constant byte address 0x4 - core index']
  #allocation1 [shape = 'u32[72,128]{1,0:T(1,128)}', space=vmem, size = 0x9000, scoped, tag = 'internal scratch']
  %s0 = inlined_call_operand.vmem [shape: f32[8,32], index: 0, kind: input, shape index: {}]
  %s1 = inlined_call_operand.hbm [shape: f32[8,32], index: 1, kind: input, shape index: {}]
  %s2 = inlined_call_operand.hbm [shape: f32[8,32], index: 2, kind: input, shape index: {}]
  %s3 = inlined_call_operand.vmem [shape: f32[8,1], index: 3, kind: input, shape index: {}]
  %s4 = inlined_call_operand.hbm [shape: f32[1,1,1], index: 4, kind: output, shape index: {}]
  %s5 = sld [smem:[#allocation0]]
  $region38: #{tpu_custom_call.1} parent=0
    _
  %s7 = ssub.s32 1, %s5
  %s8 = scalar_select 0, %s7, %s5
  $region1: #{tpu_custom_call.1} parent=0
    #allocation2 [shape = 'u8[4096]{0}', space=vmem, size = 0x1000, scoped, tag = 'input window, operand 1, single buffered']
    #allocation3 [shape = 's32[1]{0}', space=sflag, size = 0x4, scoped, tag = 'scoped memory for tpu_custom_call.1']
    #allocation4 [shape = 's32[1]{0}', space=sflag, size = 0x4, scoped, tag = 'scoped memory for tpu_custom_call.1']
    #allocation5 [shape = 'u8[4096]{0}', space=vmem, size = 0x1000, scoped, tag = 'input window, operand 2, single buffered']
    #allocation6 [shape = 's32[1]{0}', space=sflag, size = 0x4, scoped, tag = 'scoped memory for tpu_custom_call.1']
    #allocation7 [shape = 'u8[512]{0}', space=vmem, size = 0x400, scoped, tag = 'output window, operand 0, single buffered']
    %9 = vsyncpa [#allocation3], 0
    %10 = vsyncpa [#allocation6], 0
    %11 = vsyncpa [#allocation4], 0
    // Predicated region
    $region2: #{tpu_custom_call.1} parent=1 // pred_check
      _
    $region3: #{tpu_custom_call.1} parent=1 // pred_check_branch
      %13 = sbr.rel (0) target = $region5
    $region4: #{tpu_custom_call.1} parent=1 // pred_region
      %s14 = sadd.s32 0, 0
      %p15 = scmp.lt.s32.totalorder %s14, 0
      %s16 = scalar_select %p15, %s14, 0
      %s17 = smul.addr %s16, 8
      %s18 = scalar_lea.vmem %s0, %s17
      %s19 = sadd.s32 0, 0
    $region5: #{tpu_custom_call.1} parent=1 // pred_fallthru
      _
    // Predicated region
    $region6: #{tpu_custom_call.1} parent=1 // pred_check
      _
    $region7: #{tpu_custom_call.1} parent=1 // pred_check_branch
      %21 = sbr.rel (0) target = $region9
    $region8: #{tpu_custom_call.1} parent=1 // pred_region
      %s22 = sadd.s32 0, 0
      %24 = vsyncadd [#allocation3], 0
      %s25 = smul.addr %s22, 8
      %s26 = scalar_lea.hbm %s1, %s25
      %s28 = sshll.u32 %s26, 4
      %s29 = int_to_ptr.hbm [resolvable:$true] %s28
      %s30 = sshll.u32 [#allocation2], 4
      %s31 = int_to_ptr.vmem [resolvable:$true] %s30
      %33 = dma.hbm_to_vmem [thread:$0]  %s29, 128, %s31, [#allocation3]
    $region9: #{tpu_custom_call.1} parent=1 // pred_fallthru
      _
    // Predicated region
    $region10: #{tpu_custom_call.1} parent=1 // pred_check
      _
    $region11: #{tpu_custom_call.1} parent=1 // pred_check_branch
      %35 = sbr.rel (0) target = $region13
    $region12: #{tpu_custom_call.1} parent=1 // pred_region
      %s36 = sadd.s32 0, 0
      %38 = vsyncadd [#allocation6], 0
      %s39 = smul.addr %s36, 8
      %s40 = scalar_lea.hbm %s2, %s39
      %s42 = sshll.u32 %s40, 4
      %s43 = int_to_ptr.hbm [resolvable:$true] %s42
      %s44 = sshll.u32 [#allocation5], 4
      %s45 = int_to_ptr.vmem [resolvable:$true] %s44
      %47 = dma.hbm_to_vmem [thread:$0]  %s43, 128, %s45, [#allocation6]
    $region13: #{tpu_custom_call.1} parent=1 // pred_fallthru
      _
    // Predicated region
    $region14: #{tpu_custom_call.1} parent=1 // pred_check
      _
    $region15: #{tpu_custom_call.1} parent=1 // pred_check_branch
      %49 = sbr.rel (0) target = $region17
    $region16: #{tpu_custom_call.1} parent=1 // pred_region
      %s50 = sadd.s32 0, 0
      %p51 = scmp.lt.s32.totalorder %s50, 0
      %s52 = scalar_select %p51, %s50, 0
      %s53 = smul.addr %s52, 8
      %s54 = scalar_lea.vmem %s3, %s53
      %s55 = sadd.s32 0, 0
    $region17: #{tpu_custom_call.1} parent=1 // pred_fallthru
      _
    // Predicated region
    $region18: #{tpu_custom_call.1} parent=1 // pred_check
      _
    $region19: #{tpu_custom_call.1} parent=1 // pred_check_branch
      %57 = sbr.rel (0) target = $region21
    $region20: #{tpu_custom_call.1} parent=1 // pred_region
      %59 = dma.done [#allocation3], 128
    $region21: #{tpu_custom_call.1} parent=1 // pred_fallthru
      _
    // Predicated region
    $region22: #{tpu_custom_call.1} parent=1 // pred_check
      _
    $region23: #{tpu_custom_call.1} parent=1 // pred_check_branch
      %61 = sbr.rel (0) target = $region25
    $region24: #{tpu_custom_call.1} parent=1 // pred_region
      %63 = dma.done [#allocation6], 128
    $region25: #{tpu_custom_call.1} parent=1 // pred_fallthru
      _
    %s64 = sadd.s32 0, 0
    %p65 = scmp.lt.s32.totalorder %s64, 0
    %s66 = scalar_select %p65, %s64, 0
    %s67 = smul.addr %s66, 8
    %s68 = scalar_lea.vmem %s0, %s67
    %s69 = sadd.s32 0, 0
    %p70 = scmp.lt.s32.totalorder %s69, 0
    %s71 = scalar_select %p70, %s69, 0
    %s72 = smul.addr %s71, 8
    %s73 = scalar_lea.vmem %s3, %s72
    %s74 = sadd.s32 0, 0
    %p75 = scmp.lt.s32.totalorder %s74, 0
    %s76 = scalar_select %p75, %s74, 0
    %s77 = smul.addr %s76, 8
    %s78 = scalar_lea.vmem %s0, %s77
    %s79 = sadd.s32 0, 0
    %s80 = sadd.s32 0, 0
    %s81 = sadd.s32 0, 0
    %s82 = sadd.s32 0, 0
    %p83 = scmp.lt.s32.totalorder %s82, 0
    %s84 = scalar_select %p83, %s82, 0
    %s85 = smul.addr %s84, 8
    %s86 = scalar_lea.vmem %s3, %s85
    %s87 = sadd.s32 0, 0
    %p88 = scmp.eq.s32.totalorder 0, 0
    // Predicated region
    $region26: #{tpu_custom_call.1} parent=1 // pred_check
      %p89 = pneg %p88
    $region27: #{tpu_custom_call.1} parent=1 // pred_check_branch
      %91 = sbr.rel (%p89) target = $region29
    $region28: #{tpu_custom_call.1} parent=1 // pred_region
      %vm92 = vcmask 0
      %93 = vst.msk [vmem:[#allocation7] sm:$0x1] %vm92, 0.0
    $region29: #{tpu_custom_call.1} parent=1 // pred_fallthru
      _
    %v94 = vld [vmem:[%s78] sm:$0xff]
    %v95 = vld [vmem:[#allocation2] sm:$0xff]
    %v96 = vld [vmem:[#allocation5] sm:$0xff]
    %v97 = vsub.f32 %v94, %v95
    %v98 = vsub.f32 %v94, %v96
    %v99 = vmul.f32 %v97, %v97
    %v100 = vmul.f32 %v98, %v98
    %v101 = vsub.f32 %v99, %v100
    %vm102 = vcmask 261120
    %v103 = vsel %vm102, %v101, 0.0
    %104 = vadd.xlane.f32.xlu0 %v103
    %v105 = vpop.xlane.xlu0 %104
    %s106 = sadd.s32 0, 0
    %s107 = smul.u32 %s106, 8
    %v108 = vlaneseq
    %v109 = vshrl.u32 %v108, 7
    %v110 = vstv %s107
    %v111 = vadd.s32 %v110, %v109
    %vm112 = vcmp.lt.s32.totalorder %v111, 8
    %v113 = vld [vmem:[%s86] sm:$0xff]
    %v114 = vadd.f32 %v105, %v113
    %v115 = vsel %vm112, %v114, 0.0
    %v116 = vld [vmem:[#allocation7] sm:$0x1]
    %v117 = vmax.f32 %v115, 0.0
    %vm118 = vcmask 7168
    %v119 = vsel %vm118, %v117, 0.0
    %120 = vadd.xlane.f32.xlu0 %v119
    %v121 = vpop.xlane.xlu0 %120
    %v122 = vrot.slane %v121, 4
    %v123 = vadd.f32 %v121, %v122
    %v124 = vrot.slane %v123, 2
    %v125 = vadd.f32 %v123, %v124
    %v126 = vrot.slane %v125, 1
    %v127 = vadd.f32 %v125, %v126
    %s128 = vtos %v127
    %v129 = vstv %s128
    %v130 = vadd.f32 %v116, %v129
    %vm131 = vcmask 0
    %132 = vst.msk [vmem:[#allocation7] sm:$0x1] %vm131, %v130
    // Predicated region
    $region30: #{tpu_custom_call.1} parent=1 // pred_check
      _
    $region31: #{tpu_custom_call.1} parent=1 // pred_check_branch
      %134 = sbr.rel (0) target = $region33
    $region32: #{tpu_custom_call.1} parent=1 // pred_region
      %136 = vsyncadd [#allocation4], 0
      %s138 = sshll.u32 [#allocation7], 4
      %s139 = int_to_ptr.vmem [resolvable:$true] %s138
      %s140 = sshll.u32 %s4, 4
      %s141 = int_to_ptr.hbm [resolvable:$true] %s140
      %143 = dma.vmem_to_hbm [thread:$0]  %s139, 16, %s141, [#allocation4]
    $region33: #{tpu_custom_call.1} parent=1 // pred_fallthru
      _
    // Predicated region
    $region34: #{tpu_custom_call.1} parent=1 // pred_check
      _
    $region35: #{tpu_custom_call.1} parent=1 // pred_check_branch
      %145 = sbr.rel (0) target = $region37
    $region36: #{tpu_custom_call.1} parent=1 // pred_region
      %147 = dma.done [#allocation4], 16
    $region37: #{tpu_custom_call.1} parent=1 // pred_fallthru
      _
    %148 = vsyncpa [#allocation3], 1
    %149 = vsyncpa [#allocation6], 1
    %150 = vsyncpa [#allocation4], 1

</llo_original>
